<compile_context>
chip_gen: v7x
topology: tpu7x:2x2x1
jax: 0.10.0
libtpu: 0.0.40
codegen_flags: <defaults>
</compile_context>

<pallas_src>
import jax
import jax.numpy as jnp
from jax.experimental import pallas as pl
from jax.experimental.pallas import tpu as pltpu


# --------------------------------------------------------------------------
# Kernel
# --------------------------------------------------------------------------
def _time_upsample2x_kernel(x_ref, o_ref):
    # x_ref: (Nb, T, Ls, 128)   o_ref: (Nb, 1 + 2*(T-1), Ls, 128)
    T = x_ref.shape[1]
    t_ = T - 1
    out_dt = o_ref.dtype

    # First frame passes through untouched.
    o_ref[:, 0, :, :] = x_ref[:, 0, :, :]

    # Static unroll over the (small) time axis.  Time is a leading block dim,
    # so every load/store below is a fully dense (Nb, Ls, 128) tile.
    for k in range(t_):
        r = x_ref[:, k + 1, :, :].astype(jnp.float32)            # rest[k]
        p = x_ref[:, max(k, 1), :, :].astype(jnp.float32)        # rest[max(k-1,0)]
        n = x_ref[:, min(k + 2, t_), :, :].astype(jnp.float32)   # rest[min(k+1,t_-1)]
        o_ref[:, 1 + 2 * k, :, :] = (0.75 * r + 0.25 * p).astype(out_dt)
        o_ref[:, 2 + 2 * k, :, :] = (0.75 * r + 0.25 * n).astype(out_dt)


# --------------------------------------------------------------------------
# Block-size selection helpers (exact divisors -> no partial/edge blocks)
# --------------------------------------------------------------------------
def _largest_divisor_leq(n, cap):
    cap = max(1, min(n, cap))
    for d in range(cap, 0, -1):
        if n % d == 0:
            return d
    return 1


def _pick_ls_block(l128, cap, sub_mult):
    """Largest block along the L//128 axis that is <= cap and either a
    multiple of `sub_mult` (sublane granularity for the dtype) or the full
    extent (always legal)."""
    if l128 <= cap:
        return l128
    start = cap - (cap % sub_mult)
    for cand in range(start, 0, -sub_mult):
        if l128 % cand == 0:
            return cand
    return l128  # fallback: full extent (legal, just a bigger block)


# --------------------------------------------------------------------------
# Wrapper
# --------------------------------------------------------------------------
def time_upsample2x(x, *, target_block_bytes=1 << 20):
    """x: (B, C, T, H, W) -> (B, C, 1 + 2*(T-1), H, W) if T > 1 else x."""
    B, C, T, H, W = x.shape
    if T <= 1:
        return x

    N = B * C
    L = H * W
    T_out = 1 + 2 * (T - 1)
    itemsize = x.dtype.itemsize

    # ---- present a lane-dense (multiple-of-128) spatial axis ----
    x_r = x.reshape(N, T, L)
    Lp = ((L + 127) // 128) * 128
    if Lp != L:
        # Only hit when H*W is not a multiple of 128 (costs one extra pad pass).
        x_r = jnp.pad(x_r, ((0, 0), (0, 0), (0, Lp - L)))
    L128 = Lp // 128
    x4 = x_r.reshape(N, T, L128, 128)

    # ---- choose block sizes: ~1 MiB input block => ~6 MiB total residency ----
    sub_mult = 8 * max(1, 4 // itemsize)              # f32: 8, bf16: 16, i8: 32
    slab_cap = max(1, target_block_bytes // (itemsize * T * 128))  # Nb*Ls budget
    ls = _pick_ls_block(L128, slab_cap, sub_mult)
    nb = _largest_divisor_leq(N, max(1, slab_cap // ls))
    # Keep >= 2 grid steps where possible so both v7x TensorCores get work.
    if (N // nb) * (L128 // ls) < 2 and N > 1:
        nb = _largest_divisor_leq(N, max(1, N // 2))

    grid = (N // nb, L128 // ls)

    cost = pl.CostEstimate(
        flops=6 * (T - 1) * N * Lp,                    # 2 muls + 1 add per blended elem
        transcendentals=0,
        bytes_accessed=itemsize * N * Lp * (T + T_out),
    )

    out4 = pl.pallas_call(
        _time_upsample2x_kernel,
        out_shape=jax.ShapeDtypeStruct((N, T_out, L128, 128), x.dtype),
        grid=grid,
        in_specs=[pl.BlockSpec((nb, T, ls, 128), lambda i, j: (i, 0, j, 0))],
        out_specs=pl.BlockSpec((nb, T_out, ls, 128), lambda i, j: (i, 0, j, 0)),
        compiler_params=pltpu.CompilerParams(
            dimension_semantics=("parallel", "parallel")),
        cost_estimate=cost,
    )(x4)

    out = out4.reshape(N, T_out, Lp)
    if Lp != L:
        out = out[:, :, :L]
    return out.reshape(B, C, T_out, H, W)


# --------------------------------------------------------------------------
# Pure-JAX reference (F.interpolate scale=(2,1,1), trilinear, align_corners=False
# applied to x[:, :, 1:], concatenated with x[:, :, :1]).
# --------------------------------------------------------------------------
def _reference(x):
    B, C, T, H, W = x.shape
    first = x[:, :, :1]
    rest = x[:, :, 1:]
    t_ = T - 1
    prev = jnp.concatenate([rest[:, :, :1], rest[:, :, :-1]], axis=2)
    nxt = jnp.concatenate([rest[:, :, 1:], rest[:, :, -1:]], axis=2)
    ev = 0.75 * rest + 0.25 * prev
    od = 0.75 * rest + 0.25 * nxt
    inter = jnp.stack([ev, od], axis=3).reshape(B, C, 2 * t_, H, W)
    return jnp.concatenate([first, inter], axis=2)


if __name__ == "__main__":
    key = jax.random.PRNGKey(0)

    # Main test: B=2, C=4, T=8, H=W=16.
    B, C, T, H, W = 2, 4, 8, 16, 16
    x = jax.random.normal(key, (B, C, T, H, W), dtype=jnp.float32)
    y = jax.block_until_ready(time_upsample2x(x))
    y_ref = _reference(x)
    assert y.shape == (B, C, 1 + 2 * (T - 1), H, W), y.shape
    assert jnp.allclose(y, y_ref, atol=1e-6, rtol=1e-6), "mismatch vs reference"

    # T == 1 path: identity.
    x1 = x[:, :, :1]
    y1 = jax.block_until_ready(time_upsample2x(x1))
    assert jnp.array_equal(y1, x1)

    # Non-multiple-of-128 spatial size + small T (exercises the lane-pad path).
    xb = jax.random.normal(jax.random.PRNGKey(1), (1, 2, 3, 10, 10), dtype=jnp.float32)
    yb = jax.block_until_ready(time_upsample2x(xb))
    assert jnp.allclose(yb, _reference(xb), atol=1e-6, rtol=1e-6)

    # bf16 input: blend is accumulated in f32 inside the kernel.
    xh = x.astype(jnp.bfloat16)
    yh = jax.block_until_ready(time_upsample2x(xh))
    yh_ref = _reference(xh.astype(jnp.float32)).astype(jnp.bfloat16)
    assert jnp.allclose(yh.astype(jnp.float32), yh_ref.astype(jnp.float32),
                        atol=2e-2, rtol=2e-2)

    print("KERNEL_OK")
</pallas_src>

<mosaic_0001>
module attributes {stable_mosaic.version = 11 : i64} {
  func.func @_time_upsample2x_kernel(%arg0: i32, %arg1: i32, %arg2: memref<4x8x2x128xf32, #tpu.memory_space<vmem>>, %arg3: memref<4x15x2x128xf32, #tpu.memory_space<vmem>>) attributes {dimension_semantics = [#tpu.dimension_semantics<parallel>, #tpu.dimension_semantics<parallel>], iteration_bounds = array<i64: 2, 1>, scalar_prefetch = 0 : i64, scratch_operands = 0 : i64, tpu.core_type = #tpu.core_type<tc>, window_params = [{transform_indices = @transform_0, window_bounds = array<i64: 4, 8, 2, 128>}, {transform_indices = @transform_1, window_bounds = array<i64: 4, 15, 2, 128>}]} {
    %c0 = arith.constant 0 : index
    %c0_0 = arith.constant 0 : index
    %c0_1 = arith.constant 0 : index
    %c0_2 = arith.constant 0 : index
    %0 = vector.load %arg2[%c0, %c0_0, %c0_1, %c0_2] : memref<4x8x2x128xf32, #tpu.memory_space<vmem>>, vector<4x1x2x128xf32>
    %1 = vector.shape_cast %0 : vector<4x1x2x128xf32> to vector<4x2x128xf32>
    %c0_3 = arith.constant 0 : index
    %c0_4 = arith.constant 0 : index
    %c0_5 = arith.constant 0 : index
    %c0_6 = arith.constant 0 : index
    %2 = vector.load %arg3[%c0_3, %c0_4, %c0_5, %c0_6] : memref<4x15x2x128xf32, #tpu.memory_space<vmem>>, vector<4x1x2x128xf32>
    %3 = vector.shape_cast %2 : vector<4x1x2x128xf32> to vector<4x2x128xf32>
    %4 = vector.shape_cast %1 : vector<4x2x128xf32> to vector<4x1x2x128xf32>
    tpu.vector_store %arg3[%c0_3, %c0_4, %c0_5, %c0_6], %4 {strides = array<i32>} : memref<4x15x2x128xf32, #tpu.memory_space<vmem>>, vector<4x1x2x128xf32>,
    %c0_7 = arith.constant 0 : index
    %c1 = arith.constant 1 : index
    %c0_8 = arith.constant 0 : index
    %c0_9 = arith.constant 0 : index
    %5 = vector.load %arg2[%c0_7, %c1, %c0_8, %c0_9] : memref<4x8x2x128xf32, #tpu.memory_space<vmem>>, vector<4x1x2x128xf32>
    %6 = vector.shape_cast %5 : vector<4x1x2x128xf32> to vector<4x2x128xf32>
    %c0_10 = arith.constant 0 : index
    %c1_11 = arith.constant 1 : index
    %c0_12 = arith.constant 0 : index
    %c0_13 = arith.constant 0 : index
    %7 = vector.load %arg2[%c0_10, %c1_11, %c0_12, %c0_13] : memref<4x8x2x128xf32, #tpu.memory_space<vmem>>, vector<4x1x2x128xf32>
    %8 = vector.shape_cast %7 : vector<4x1x2x128xf32> to vector<4x2x128xf32>
    %c0_14 = arith.constant 0 : index
    %c2 = arith.constant 2 : index
    %c0_15 = arith.constant 0 : index
    %c0_16 = arith.constant 0 : index
    %9 = vector.load %arg2[%c0_14, %c2, %c0_15, %c0_16] : memref<4x8x2x128xf32, #tpu.memory_space<vmem>>, vector<4x1x2x128xf32>
    %10 = vector.shape_cast %9 : vector<4x1x2x128xf32> to vector<4x2x128xf32>
    %cst = arith.constant 7.500000e-01 : f32
    %11 = vector.broadcast %cst : f32 to vector<4x2x128xf32>
    %12 = arith.mulf %11, %6 : vector<4x2x128xf32>
    %cst_17 = arith.constant 2.500000e-01 : f32
    %13 = vector.broadcast %cst_17 : f32 to vector<4x2x128xf32>
    %14 = arith.mulf %13, %8 : vector<4x2x128xf32>
    %15 = arith.addf %12, %14 : vector<4x2x128xf32>
    %c0_18 = arith.constant 0 : index
    %c1_19 = arith.constant 1 : index
    %c0_20 = arith.constant 0 : index
    %c0_21 = arith.constant 0 : index
    %16 = vector.load %arg3[%c0_18, %c1_19, %c0_20, %c0_21] : memref<4x15x2x128xf32, #tpu.memory_space<vmem>>, vector<4x1x2x128xf32>
    %17 = vector.shape_cast %16 : vector<4x1x2x128xf32> to vector<4x2x128xf32>
    %18 = vector.shape_cast %15 : vector<4x2x128xf32> to vector<4x1x2x128xf32>
    tpu.vector_store %arg3[%c0_18, %c1_19, %c0_20, %c0_21], %18 {strides = array<i32>} : memref<4x15x2x128xf32, #tpu.memory_space<vmem>>, vector<4x1x2x128xf32>,
    %cst_22 = arith.constant 7.500000e-01 : f32
    %19 = vector.broadcast %cst_22 : f32 to vector<4x2x128xf32>
    %20 = arith.mulf %19, %6 : vector<4x2x128xf32>
    %cst_23 = arith.constant 2.500000e-01 : f32
    %21 = vector.broadcast %cst_23 : f32 to vector<4x2x128xf32>
    %22 = arith.mulf %21, %10 : vector<4x2x128xf32>
    %23 = arith.addf %20, %22 : vector<4x2x128xf32>
    %c0_24 = arith.constant 0 : index
    %c2_25 = arith.constant 2 : index
    %c0_26 = arith.constant 0 : index
    %c0_27 = arith.constant 0 : index
    %24 = vector.load %arg3[%c0_24, %c2_25, %c0_26, %c0_27] : memref<4x15x2x128xf32, #tpu.memory_space<vmem>>, vector<4x1x2x128xf32>
    %25 = vector.shape_cast %24 : vector<4x1x2x128xf32> to vector<4x2x128xf32>
    %26 = vector.shape_cast %23 : vector<4x2x128xf32> to vector<4x1x2x128xf32>
    tpu.vector_store %arg3[%c0_24, %c2_25, %c0_26, %c0_27], %26 {strides = array<i32>} : memref<4x15x2x128xf32, #tpu.memory_space<vmem>>, vector<4x1x2x128xf32>,
    %c0_28 = arith.constant 0 : index
    %c2_29 = arith.constant 2 : index
    %c0_30 = arith.constant 0 : index
    %c0_31 = arith.constant 0 : index
    %27 = vector.load %arg2[%c0_28, %c2_29, %c0_30, %c0_31] : memref<4x8x2x128xf32, #tpu.memory_space<vmem>>, vector<4x1x2x128xf32>
    %28 = vector.shape_cast %27 : vector<4x1x2x128xf32> to vector<4x2x128xf32>
    %c0_32 = arith.constant 0 : index
    %c1_33 = arith.constant 1 : index
    %c0_34 = arith.constant 0 : index
    %c0_35 = arith.constant 0 : index
    %29 = vector.load %arg2[%c0_32, %c1_33, %c0_34, %c0_35] : memref<4x8x2x128xf32, #tpu.memory_space<vmem>>, vector<4x1x2x128xf32>
    %30 = vector.shape_cast %29 : vector<4x1x2x128xf32> to vector<4x2x128xf32>
    %c0_36 = arith.constant 0 : index
    %c3 = arith.constant 3 : index
    %c0_37 = arith.constant 0 : index
    %c0_38 = arith.constant 0 : index
    %31 = vector.load %arg2[%c0_36, %c3, %c0_37, %c0_38] : memref<4x8x2x128xf32, #tpu.memory_space<vmem>>, vector<4x1x2x128xf32>
    %32 = vector.shape_cast %31 : vector<4x1x2x128xf32> to vector<4x2x128xf32>
    %cst_39 = arith.constant 7.500000e-01 : f32
    %33 = vector.broadcast %cst_39 : f32 to vector<4x2x128xf32>
    %34 = arith.mulf %33, %28 : vector<4x2x128xf32>
    %cst_40 = arith.constant 2.500000e-01 : f32
    %35 = vector.broadcast %cst_40 : f32 to vector<4x2x128xf32>
    %36 = arith.mulf %35, %30 : vector<4x2x128xf32>
    %37 = arith.addf %34, %36 : vector<4x2x128xf32>
    %c0_41 = arith.constant 0 : index
    %c3_42 = arith.constant 3 : index
    %c0_43 = arith.constant 0 : index
    %c0_44 = arith.constant 0 : index
    %38 = vector.load %arg3[%c0_41, %c3_42, %c0_43, %c0_44] : memref<4x15x2x128xf32, #tpu.memory_space<vmem>>, vector<4x1x2x128xf32>
    %39 = vector.shape_cast %38 : vector<4x1x2x128xf32> to vector<4x2x128xf32>
    %40 = vector.shape_cast %37 : vector<4x2x128xf32> to vector<4x1x2x128xf32>
    tpu.vector_store %arg3[%c0_41, %c3_42, %c0_43, %c0_44], %40 {strides = array<i32>} : memref<4x15x2x128xf32, #tpu.memory_space<vmem>>, vector<4x1x2x128xf32>,
    %cst_45 = arith.constant 7.500000e-01 : f32
    %41 = vector.broadcast %cst_45 : f32 to vector<4x2x128xf32>
    %42 = arith.mulf %41, %28 : vector<4x2x128xf32>
    %cst_46 = arith.constant 2.500000e-01 : f32
    %43 = vector.broadcast %cst_46 : f32 to vector<4x2x128xf32>
    %44 = arith.mulf %43, %32 : vector<4x2x128xf32>
    %45 = arith.addf %42, %44 : vector<4x2x128xf32>
    %c0_47 = arith.constant 0 : index
    %c4 = arith.constant 4 : index
    %c0_48 = arith.constant 0 : index
    %c0_49 = arith.constant 0 : index
    %46 = vector.load %arg3[%c0_47, %c4, %c0_48, %c0_49] : memref<4x15x2x128xf32, #tpu.memory_space<vmem>>, vector<4x1x2x128xf32>
    %47 = vector.shape_cast %46 : vector<4x1x2x128xf32> to vector<4x2x128xf32>
    %48 = vector.shape_cast %45 : vector<4x2x128xf32> to vector<4x1x2x128xf32>
    tpu.vector_store %arg3[%c0_47, %c4, %c0_48, %c0_49], %48 {strides = array<i32>} : memref<4x15x2x128xf32, #tpu.memory_space<vmem>>, vector<4x1x2x128xf32>,
    %c0_50 = arith.constant 0 : index
    %c3_51 = arith.constant 3 : index
    %c0_52 = arith.constant 0 : index
    %c0_53 = arith.constant 0 : index
    %49 = vector.load %arg2[%c0_50, %c3_51, %c0_52, %c0_53] : memref<4x8x2x128xf32, #tpu.memory_space<vmem>>, vector<4x1x2x128xf32>
    %50 = vector.shape_cast %49 : vector<4x1x2x128xf32> to vector<4x2x128xf32>
    %c0_54 = arith.constant 0 : index
    %c2_55 = arith.constant 2 : index
    %c0_56 = arith.constant 0 : index
    %c0_57 = arith.constant 0 : index
    %51 = vector.load %arg2[%c0_54, %c2_55, %c0_56, %c0_57] : memref<4x8x2x128xf32, #tpu.memory_space<vmem>>, vector<4x1x2x128xf32>
    %52 = vector.shape_cast %51 : vector<4x1x2x128xf32> to vector<4x2x128xf32>
    %c0_58 = arith.constant 0 : index
    %c4_59 = arith.constant 4 : index
    %c0_60 = arith.constant 0 : index
    %c0_61 = arith.constant 0 : index
    %53 = vector.load %arg2[%c0_58, %c4_59, %c0_60, %c0_61] : memref<4x8x2x128xf32, #tpu.memory_space<vmem>>, vector<4x1x2x128xf32>
    %54 = vector.shape_cast %53 : vector<4x1x2x128xf32> to vector<4x2x128xf32>
    %cst_62 = arith.constant 7.500000e-01 : f32
    %55 = vector.broadcast %cst_62 : f32 to vector<4x2x128xf32>
    %56 = arith.mulf %55, %50 : vector<4x2x128xf32>
    %cst_63 = arith.constant 2.500000e-01 : f32
    %57 = vector.broadcast %cst_63 : f32 to vector<4x2x128xf32>
    %58 = arith.mulf %57, %52 : vector<4x2x128xf32>
    %59 = arith.addf %56, %58 : vector<4x2x128xf32>
    %c0_64 = arith.constant 0 : index
    %c5 = arith.constant 5 : index
    %c0_65 = arith.constant 0 : index
    %c0_66 = arith.constant 0 : index
    %60 = vector.load %arg3[%c0_64, %c5, %c0_65, %c0_66] : memref<4x15x2x128xf32, #tpu.memory_space<vmem>>, vector<4x1x2x128xf32>
    %61 = vector.shape_cast %60 : vector<4x1x2x128xf32> to vector<4x2x128xf32>
    %62 = vector.shape_cast %59 : vector<4x2x128xf32> to vector<4x1x2x128xf32>
    tpu.vector_store %arg3[%c0_64, %c5, %c0_65, %c0_66], %62 {strides = array<i32>} : memref<4x15x2x128xf32, #tpu.memory_space<vmem>>, vector<4x1x2x128xf32>,
    %cst_67 = arith.constant 7.500000e-01 : f32
    %63 = vector.broadcast %cst_67 : f32 to vector<4x2x128xf32>
    %64 = arith.mulf %63, %50 : vector<4x2x128xf32>
    %cst_68 = arith.constant 2.500000e-01 : f32
    %65 = vector.broadcast %cst_68 : f32 to vector<4x2x128xf32>
    %66 = arith.mulf %65, %54 : vector<4x2x128xf32>
    %67 = arith.addf %64, %66 : vector<4x2x128xf32>
    %c0_69 = arith.constant 0 : index
    %c6 = arith.constant 6 : index
    %c0_70 = arith.constant 0 : index
    %c0_71 = arith.constant 0 : index
    %68 = vector.load %arg3[%c0_69, %c6, %c0_70, %c0_71] : memref<4x15x2x128xf32, #tpu.memory_space<vmem>>, vector<4x1x2x128xf32>
    %69 = vector.shape_cast %68 : vector<4x1x2x128xf32> to vector<4x2x128xf32>
    %70 = vector.shape_cast %67 : vector<4x2x128xf32> to vector<4x1x2x128xf32>
    tpu.vector_store %arg3[%c0_69, %c6, %c0_70, %c0_71], %70 {strides = array<i32>} : memref<4x15x2x128xf32, #tpu.memory_space<vmem>>, vector<4x1x2x128xf32>,
    %c0_72 = arith.constant 0 : index
    %c4_73 = arith.constant 4 : index
    %c0_74 = arith.constant 0 : index
    %c0_75 = arith.constant 0 : index
    %71 = vector.load %arg2[%c0_72, %c4_73, %c0_74, %c0_75] : memref<4x8x2x128xf32, #tpu.memory_space<vmem>>, vector<4x1x2x128xf32>
    %72 = vector.shape_cast %71 : vector<4x1x2x128xf32> to vector<4x2x128xf32>
    %c0_76 = arith.constant 0 : index
    %c3_77 = arith.constant 3 : index
    %c0_78 = arith.constant 0 : index
    %c0_79 = arith.constant 0 : index
    %73 = vector.load %arg2[%c0_76, %c3_77, %c0_78, %c0_79] : memref<4x8x2x128xf32, #tpu.memory_space<vmem>>, vector<4x1x2x128xf32>
    %74 = vector.shape_cast %73 : vector<4x1x2x128xf32> to vector<4x2x128xf32>
    %c0_80 = arith.constant 0 : index
    %c5_81 = arith.constant 5 : index
    %c0_82 = arith.constant 0 : index
    %c0_83 = arith.constant 0 : index
    %75 = vector.load %arg2[%c0_80, %c5_81, %c0_82, %c0_83] : memref<4x8x2x128xf32, #tpu.memory_space<vmem>>, vector<4x1x2x128xf32>
    %76 = vector.shape_cast %75 : vector<4x1x2x128xf32> to vector<4x2x128xf32>
    %cst_84 = arith.constant 7.500000e-01 : f32
    %77 = vector.broadcast %cst_84 : f32 to vector<4x2x128xf32>
    %78 = arith.mulf %77, %72 : vector<4x2x128xf32>
    %cst_85 = arith.constant 2.500000e-01 : f32
    %79 = vector.broadcast %cst_85 : f32 to vector<4x2x128xf32>
    %80 = arith.mulf %79, %74 : vector<4x2x128xf32>
    %81 = arith.addf %78, %80 : vector<4x2x128xf32>
    %c0_86 = arith.constant 0 : index
    %c7 = arith.constant 7 : index
    %c0_87 = arith.constant 0 : index
    %c0_88 = arith.constant 0 : index
    %82 = vector.load %arg3[%c0_86, %c7, %c0_87, %c0_88] : memref<4x15x2x128xf32, #tpu.memory_space<vmem>>, vector<4x1x2x128xf32>
    %83 = vector.shape_cast %82 : vector<4x1x2x128xf32> to vector<4x2x128xf32>
    %84 = vector.shape_cast %81 : vector<4x2x128xf32> to vector<4x1x2x128xf32>
    tpu.vector_store %arg3[%c0_86, %c7, %c0_87, %c0_88], %84 {strides = array<i32>} : memref<4x15x2x128xf32, #tpu.memory_space<vmem>>, vector<4x1x2x128xf32>,
    %cst_89 = arith.constant 7.500000e-01 : f32
    %85 = vector.broadcast %cst_89 : f32 to vector<4x2x128xf32>
    %86 = arith.mulf %85, %72 : vector<4x2x128xf32>
    %cst_90 = arith.constant 2.500000e-01 : f32
    %87 = vector.broadcast %cst_90 : f32 to vector<4x2x128xf32>
    %88 = arith.mulf %87, %76 : vector<4x2x128xf32>
    %89 = arith.addf %86, %88 : vector<4x2x128xf32>
    %c0_91 = arith.constant 0 : index
    %c8 = arith.constant 8 : index
    %c0_92 = arith.constant 0 : index
    %c0_93 = arith.constant 0 : index
    %90 = vector.load %arg3[%c0_91, %c8, %c0_92, %c0_93] : memref<4x15x2x128xf32, #tpu.memory_space<vmem>>, vector<4x1x2x128xf32>
    %91 = vector.shape_cast %90 : vector<4x1x2x128xf32> to vector<4x2x128xf32>
    %92 = vector.shape_cast %89 : vector<4x2x128xf32> to vector<4x1x2x128xf32>
    tpu.vector_store %arg3[%c0_91, %c8, %c0_92, %c0_93], %92 {strides = array<i32>} : memref<4x15x2x128xf32, #tpu.memory_space<vmem>>, vector<4x1x2x128xf32>,
    %c0_94 = arith.constant 0 : index
    %c5_95 = arith.constant 5 : index
    %c0_96 = arith.constant 0 : index
    %c0_97 = arith.constant 0 : index
    %93 = vector.load %arg2[%c0_94, %c5_95, %c0_96, %c0_97] : memref<4x8x2x128xf32, #tpu.memory_space<vmem>>, vector<4x1x2x128xf32>
    %94 = vector.shape_cast %93 : vector<4x1x2x128xf32> to vector<4x2x128xf32>
    %c0_98 = arith.constant 0 : index
    %c4_99 = arith.constant 4 : index
    %c0_100 = arith.constant 0 : index
    %c0_101 = arith.constant 0 : index
    %95 = vector.load %arg2[%c0_98, %c4_99, %c0_100, %c0_101] : memref<4x8x2x128xf32, #tpu.memory_space<vmem>>, vector<4x1x2x128xf32>
    %96 = vector.shape_cast %95 : vector<4x1x2x128xf32> to vector<4x2x128xf32>
    %c0_102 = arith.constant 0 : index
    %c6_103 = arith.constant 6 : index
    %c0_104 = arith.constant 0 : index
    %c0_105 = arith.constant 0 : index
    %97 = vector.load %arg2[%c0_102, %c6_103, %c0_104, %c0_105] : memref<4x8x2x128xf32, #tpu.memory_space<vmem>>, vector<4x1x2x128xf32>
    %98 = vector.shape_cast %97 : vector<4x1x2x128xf32> to vector<4x2x128xf32>
    %cst_106 = arith.constant 7.500000e-01 : f32
    %99 = vector.broadcast %cst_106 : f32 to vector<4x2x128xf32>
    %100 = arith.mulf %99, %94 : vector<4x2x128xf32>
    %cst_107 = arith.constant 2.500000e-01 : f32
    %101 = vector.broadcast %cst_107 : f32 to vector<4x2x128xf32>
    %102 = arith.mulf %101, %96 : vector<4x2x128xf32>
    %103 = arith.addf %100, %102 : vector<4x2x128xf32>
    %c0_108 = arith.constant 0 : index
    %c9 = arith.constant 9 : index
    %c0_109 = arith.constant 0 : index
    %c0_110 = arith.constant 0 : index
    %104 = vector.load %arg3[%c0_108, %c9, %c0_109, %c0_110] : memref<4x15x2x128xf32, #tpu.memory_space<vmem>>, vector<4x1x2x128xf32>
    %105 = vector.shape_cast %104 : vector<4x1x2x128xf32> to vector<4x2x128xf32>
    %106 = vector.shape_cast %103 : vector<4x2x128xf32> to vector<4x1x2x128xf32>
    tpu.vector_store %arg3[%c0_108, %c9, %c0_109, %c0_110], %106 {strides = array<i32>} : memref<4x15x2x128xf32, #tpu.memory_space<vmem>>, vector<4x1x2x128xf32>,
    %cst_111 = arith.constant 7.500000e-01 : f32
    %107 = vector.broadcast %cst_111 : f32 to vector<4x2x128xf32>
    %108 = arith.mulf %107, %94 : vector<4x2x128xf32>
    %cst_112 = arith.constant 2.500000e-01 : f32
    %109 = vector.broadcast %cst_112 : f32 to vector<4x2x128xf32>
    %110 = arith.mulf %109, %98 : vector<4x2x128xf32>
    %111 = arith.addf %108, %110 : vector<4x2x128xf32>
    %c0_113 = arith.constant 0 : index
    %c10 = arith.constant 10 : index
    %c0_114 = arith.constant 0 : index
    %c0_115 = arith.constant 0 : index
    %112 = vector.load %arg3[%c0_113, %c10, %c0_114, %c0_115] : memref<4x15x2x128xf32, #tpu.memory_space<vmem>>, vector<4x1x2x128xf32>
    %113 = vector.shape_cast %112 : vector<4x1x2x128xf32> to vector<4x2x128xf32>
    %114 = vector.shape_cast %111 : vector<4x2x128xf32> to vector<4x1x2x128xf32>
    tpu.vector_store %arg3[%c0_113, %c10, %c0_114, %c0_115], %114 {strides = array<i32>} : memref<4x15x2x128xf32, #tpu.memory_space<vmem>>, vector<4x1x2x128xf32>,
    %c0_116 = arith.constant 0 : index
    %c6_117 = arith.constant 6 : index
    %c0_118 = arith.constant 0 : index
    %c0_119 = arith.constant 0 : index
    %115 = vector.load %arg2[%c0_116, %c6_117, %c0_118, %c0_119] : memref<4x8x2x128xf32, #tpu.memory_space<vmem>>, vector<4x1x2x128xf32>
    %116 = vector.shape_cast %115 : vector<4x1x2x128xf32> to vector<4x2x128xf32>
    %c0_120 = arith.constant 0 : index
    %c5_121 = arith.constant 5 : index
    %c0_122 = arith.constant 0 : index
    %c0_123 = arith.constant 0 : index
    %117 = vector.load %arg2[%c0_120, %c5_121, %c0_122, %c0_123] : memref<4x8x2x128xf32, #tpu.memory_space<vmem>>, vector<4x1x2x128xf32>
    %118 = vector.shape_cast %117 : vector<4x1x2x128xf32> to vector<4x2x128xf32>
    %c0_124 = arith.constant 0 : index
    %c7_125 = arith.constant 7 : index
    %c0_126 = arith.constant 0 : index
    %c0_127 = arith.constant 0 : index
    %119 = vector.load %arg2[%c0_124, %c7_125, %c0_126, %c0_127] : memref<4x8x2x128xf32, #tpu.memory_space<vmem>>, vector<4x1x2x128xf32>
    %120 = vector.shape_cast %119 : vector<4x1x2x128xf32> to vector<4x2x128xf32>
    %cst_128 = arith.constant 7.500000e-01 : f32
    %121 = vector.broadcast %cst_128 : f32 to vector<4x2x128xf32>
    %122 = arith.mulf %121, %116 : vector<4x2x128xf32>
    %cst_129 = arith.constant 2.500000e-01 : f32
    %123 = vector.broadcast %cst_129 : f32 to vector<4x2x128xf32>
    %124 = arith.mulf %123, %118 : vector<4x2x128xf32>
    %125 = arith.addf %122, %124 : vector<4x2x128xf32>
    %c0_130 = arith.constant 0 : index
    %c11 = arith.constant 11 : index
    %c0_131 = arith.constant 0 : index
    %c0_132 = arith.constant 0 : index
    %126 = vector.load %arg3[%c0_130, %c11, %c0_131, %c0_132] : memref<4x15x2x128xf32, #tpu.memory_space<vmem>>, vector<4x1x2x128xf32>
    %127 = vector.shape_cast %126 : vector<4x1x2x128xf32> to vector<4x2x128xf32>
    %128 = vector.shape_cast %125 : vector<4x2x128xf32> to vector<4x1x2x128xf32>
    tpu.vector_store %arg3[%c0_130, %c11, %c0_131, %c0_132], %128 {strides = array<i32>} : memref<4x15x2x128xf32, #tpu.memory_space<vmem>>, vector<4x1x2x128xf32>,
    %cst_133 = arith.constant 7.500000e-01 : f32
    %129 = vector.broadcast %cst_133 : f32 to vector<4x2x128xf32>
    %130 = arith.mulf %129, %116 : vector<4x2x128xf32>
    %cst_134 = arith.constant 2.500000e-01 : f32
    %131 = vector.broadcast %cst_134 : f32 to vector<4x2x128xf32>
    %132 = arith.mulf %131, %120 : vector<4x2x128xf32>
    %133 = arith.addf %130, %132 : vector<4x2x128xf32>
    %c0_135 = arith.constant 0 : index
    %c12 = arith.constant 12 : index
    %c0_136 = arith.constant 0 : index
    %c0_137 = arith.constant 0 : index
    %134 = vector.load %arg3[%c0_135, %c12, %c0_136, %c0_137] : memref<4x15x2x128xf32, #tpu.memory_space<vmem>>, vector<4x1x2x128xf32>
    %135 = vector.shape_cast %134 : vector<4x1x2x128xf32> to vector<4x2x128xf32>
    %136 = vector.shape_cast %133 : vector<4x2x128xf32> to vector<4x1x2x128xf32>
    tpu.vector_store %arg3[%c0_135, %c12, %c0_136, %c0_137], %136 {strides = array<i32>} : memref<4x15x2x128xf32, #tpu.memory_space<vmem>>, vector<4x1x2x128xf32>,
    %c0_138 = arith.constant 0 : index
    %c7_139 = arith.constant 7 : index
    %c0_140 = arith.constant 0 : index
    %c0_141 = arith.constant 0 : index
    %137 = vector.load %arg2[%c0_138, %c7_139, %c0_140, %c0_141] : memref<4x8x2x128xf32, #tpu.memory_space<vmem>>, vector<4x1x2x128xf32>
    %138 = vector.shape_cast %137 : vector<4x1x2x128xf32> to vector<4x2x128xf32>
    %c0_142 = arith.constant 0 : index
    %c6_143 = arith.constant 6 : index
    %c0_144 = arith.constant 0 : index
    %c0_145 = arith.constant 0 : index
    %139 = vector.load %arg2[%c0_142, %c6_143, %c0_144, %c0_145] : memref<4x8x2x128xf32, #tpu.memory_space<vmem>>, vector<4x1x2x128xf32>
    %140 = vector.shape_cast %139 : vector<4x1x2x128xf32> to vector<4x2x128xf32>
    %c0_146 = arith.constant 0 : index
    %c7_147 = arith.constant 7 : index
    %c0_148 = arith.constant 0 : index
    %c0_149 = arith.constant 0 : index
    %141 = vector.load %arg2[%c0_146, %c7_147, %c0_148, %c0_149] : memref<4x8x2x128xf32, #tpu.memory_space<vmem>>, vector<4x1x2x128xf32>
    %142 = vector.shape_cast %141 : vector<4x1x2x128xf32> to vector<4x2x128xf32>
    %cst_150 = arith.constant 7.500000e-01 : f32
    %143 = vector.broadcast %cst_150 : f32 to vector<4x2x128xf32>
    %144 = arith.mulf %143, %138 : vector<4x2x128xf32>
    %cst_151 = arith.constant 2.500000e-01 : f32
    %145 = vector.broadcast %cst_151 : f32 to vector<4x2x128xf32>
    %146 = arith.mulf %145, %140 : vector<4x2x128xf32>
    %147 = arith.addf %144, %146 : vector<4x2x128xf32>
    %c0_152 = arith.constant 0 : index
    %c13 = arith.constant 13 : index
    %c0_153 = arith.constant 0 : index
    %c0_154 = arith.constant 0 : index
    %148 = vector.load %arg3[%c0_152, %c13, %c0_153, %c0_154] : memref<4x15x2x128xf32, #tpu.memory_space<vmem>>, vector<4x1x2x128xf32>
    %149 = vector.shape_cast %148 : vector<4x1x2x128xf32> to vector<4x2x128xf32>
    %150 = vector.shape_cast %147 : vector<4x2x128xf32> to vector<4x1x2x128xf32>
    tpu.vector_store %arg3[%c0_152, %c13, %c0_153, %c0_154], %150 {strides = array<i32>} : memref<4x15x2x128xf32, #tpu.memory_space<vmem>>, vector<4x1x2x128xf32>,
    %cst_155 = arith.constant 7.500000e-01 : f32
    %151 = vector.broadcast %cst_155 : f32 to vector<4x2x128xf32>
    %152 = arith.mulf %151, %138 : vector<4x2x128xf32>
    %cst_156 = arith.constant 2.500000e-01 : f32
    %153 = vector.broadcast %cst_156 : f32 to vector<4x2x128xf32>
    %154 = arith.mulf %153, %142 : vector<4x2x128xf32>
    %155 = arith.addf %152, %154 : vector<4x2x128xf32>
    %c0_157 = arith.constant 0 : index
    %c14 = arith.constant 14 : index
    %c0_158 = arith.constant 0 : index
    %c0_159 = arith.constant 0 : index
    %156 = vector.load %arg3[%c0_157, %c14, %c0_158, %c0_159] : memref<4x15x2x128xf32, #tpu.memory_space<vmem>>, vector<4x1x2x128xf32>
    %157 = vector.shape_cast %156 : vector<4x1x2x128xf32> to vector<4x2x128xf32>
    %158 = vector.shape_cast %155 : vector<4x2x128xf32> to vector<4x1x2x128xf32>
    tpu.vector_store %arg3[%c0_157, %c14, %c0_158, %c0_159], %158 {strides = array<i32>} : memref<4x15x2x128xf32, #tpu.memory_space<vmem>>, vector<4x1x2x128xf32>,
    return
  }
  func.func @transform_0(%arg0: i32, %arg1: i32) -> (i32, i32, i32, i32) {
    %c0_i32 = arith.constant 0 : i32
    %c0_i32_0 = arith.constant 0 : i32
    %c0_i32_1 = arith.constant 0 : i32
    return %arg0, %c0_i32, %arg1, %c0_i32_0 : i32, i32, i32, i32
  }
  func.func @transform_1(%arg0: i32, %arg1: i32) -> (i32, i32, i32, i32) {
    %c0_i32 = arith.constant 0 : i32
    %c0_i32_0 = arith.constant 0 : i32
    %c0_i32_1 = arith.constant 0 : i32
    return %arg0, %c0_i32, %arg1, %c0_i32_0 : i32, i32, i32, i32
  }
}

</mosaic_0001>

<llo_original>
// kernel: tpu_custom_call.1
$region0: #{tpu_custom_call.1}
  #allocation0 [shape = 'u32[]', space=smem, size = 0x4, offset = 0x4, fixed_abs, tag = 'smem constant byte address 0x4 - core index']
  #allocation1 [shape = 'u32[144,128]{1,0:T(1,128)}', space=vmem, size = 0x12000, scoped, tag = 'internal scratch']
  %s0 = inlined_call_operand.hbm [shape: f32[8,8,2,128], index: 0, kind: input, shape index: {}]
  %s1 = inlined_call_operand.hbm [shape: f32[8,15,2,128], index: 1, kind: output, shape index: {}]
  %s2 = sld [smem:[#allocation0]]
  $region41: #{tpu_custom_call.1} parent=0
    _
  %s4 = ssub.s32 1, %s2
  %s5 = scalar_select 0, %s4, %s2
  $region1: #{tpu_custom_call.1} parent=0
    #allocation2 [shape = 'u8[65536]{0}', space=vmem, size = 0x10000, scoped, tag = 'input window, operand 0']
    #allocation3 [shape = 's32[2]{0}', space=sflag, size = 0x8, scoped, tag = 'scoped memory for tpu_custom_call.1']
    #allocation4 [shape = 's32[2]{0}', space=sflag, size = 0x8, scoped, tag = 'scoped memory for tpu_custom_call.1']
    #allocation5 [shape = 'u8[122880]{0}', space=vmem, size = 0x1e000, scoped, tag = 'output window, operand 0']
    %6 = vsyncpa [#allocation3], 0
    %s7 = scalar_lea.sflag [#allocation3], 1
    %8 = vsyncpa %s7, 0
    %9 = vsyncpa [#allocation4], 0
    %s10 = scalar_lea.sflag [#allocation4], 1
    %11 = vsyncpa %s10, 0
    loop: start=0, step=1, limit=4
    $region2: #{tpu_custom_call.1} parent=1 // loop_pre_header
      _
    $region3: #{tpu_custom_call.1} parent=1 // loop_header
      %s13 = sphi 0, %s17
      %p14 = scmp.ge.s32.totalorder %s13, 4
      %s20 = sphi 0, %s32
      %s21 = sphi 0, %s28
      %s22 = sphi 0, %s20
      %s23 = sphi 0, %s21
      %s24 = sphi 0, %s22
      %s25 = sphi 0, %s23
      %s37 = sphi 0, %s39
      %s40 = sphi 0, %s37
      %s41 = sphi 0, %s40
      %s57 = sphi 0, %s41
      %s65 = sphi 0, %s67
      %s68 = sphi 0, %s65
      %s69 = sphi 0, %s68
      %s85 = sphi 0, %s69
    $region4: #{tpu_custom_call.1} parent=1 // loop_header_branch
      %16 = sbr.rel (%p14) target = $region8
    $region5: #{tpu_custom_call.1} parent=1 // loop_body
      %s18 = ssub.s32 %s13, 1
      %s19 = ssub.s32 %s13, 2
      %s26 = sadd.s32 1, %s21
      %p27 = scmp.ge.s32.totalorder %s26, 1
      %s28 = scalar_select %p27, 0, %s26
      %s29 = sadd.s32 1, %s20
      %s30 = scalar_select %p27, %s29, %s20
      %p31 = scmp.ge.s32.totalorder %s30, 2
      %s32 = scalar_select %p31, 0, %s30
      %s33 = ssub.s32 %s20, %s32
      %s34 = ssub.s32 %s21, %s28
      %s35 = sor.u32 %s33, %s34
      %p36 = scmp.eq.s32.totalorder %s35, 0
      %s38 = sadd.s32 %s37, 1
      %s39 = scalar_select %p36, %s37, %s38
      %p42 = pneg %p36
      %p43 = scmp.eq.s32.totalorder %s13, 1
      %p44 = por %p42, %p43
      %p45 = scmp.ne.s32.totalorder %s37, %s40
      %p46 = scmp.eq.s32.totalorder %s13, 0
      %p47 = por %p45, %p46
      %p48 = scmp.ne.s32.totalorder %s37, %s40
      %p49 = scmp.eq.s32.totalorder %s18, 1
      %p50 = por %p48, %p49
      %p51 = scmp.ne.s32.totalorder %s40, %s41
      %p52 = scmp.eq.s32.totalorder %s18, 0
      %p53 = por %p51, %p52
      %p54 = scmp.ne.s32.totalorder %s40, %s41
      %p55 = scmp.eq.s32.totalorder %s19, 1
      %p56 = por %p54, %p55
      %p58 = scmp.ne.s32.totalorder %s41, %s57
      %p59 = scmp.eq.s32.totalorder %s19, 0
      %p60 = por %p58, %p59
      %s61 = ssub.s32 %s20, %s32
      %s62 = ssub.s32 %s21, %s28
      %s63 = sor.u32 %s61, %s62
      %p64 = scmp.eq.s32.totalorder %s63, 0
      %s66 = sadd.s32 %s65, 1
      %s67 = scalar_select %p64, %s65, %s66
      %p70 = pneg %p64
      %p71 = scmp.eq.s32.totalorder %s13, 1
      %p72 = por %p70, %p71
      %p73 = scmp.ne.s32.totalorder %s65, %s68
      %p74 = scmp.eq.s32.totalorder %s13, 0
      %p75 = por %p73, %p74
      %p76 = scmp.ne.s32.totalorder %s65, %s68
      %p77 = scmp.eq.s32.totalorder %s18, 1
      %p78 = por %p76, %p77
      %p79 = scmp.ne.s32.totalorder %s68, %s69
      %p80 = scmp.eq.s32.totalorder %s18, 0
      %p81 = por %p79, %p80
      %p82 = scmp.ne.s32.totalorder %s68, %s69
      %p83 = scmp.eq.s32.totalorder %s19, 1
      %p84 = por %p82, %p83
      %p86 = scmp.ne.s32.totalorder %s69, %s85
      %p87 = scmp.eq.s32.totalorder %s19, 0
      %p88 = por %p86, %p87
      %p89 = scmp.le.s32.totalorder 1, %s13
      %p90 = scmp.lt.s32.totalorder %s13, 3
      %p91 = pnand %p89, %p90
      %p92 = pneg %p91
      // Predicated region
      $region9: #{tpu_custom_call.1} parent=5 // pred_check
        _
      $region10: #{tpu_custom_call.1} parent=5 // pred_check_branch
        %94 = sbr.rel (%p91) target = $region12
      $region11: #{tpu_custom_call.1} parent=5 // pred_region
        %s95 = ssub.s32 %s13, 1
      $region12: #{tpu_custom_call.1} parent=5 // pred_fallthru
        _
      %p96 = scmp.lt.s32.totalorder %s13, 2
      // Predicated region
      $region13: #{tpu_custom_call.1} parent=5 // pred_check
        %p97 = pneg %p96
      $region14: #{tpu_custom_call.1} parent=5 // pred_check_branch
        %99 = sbr.rel (%p97) target = $region16
      $region15: #{tpu_custom_call.1} parent=5 // pred_region
        // Predicated region
        $region17: #{tpu_custom_call.1} parent=15 // pred_check
          %p100 = pneg %p47
        $region18: #{tpu_custom_call.1} parent=15 // pred_check_branch
          %102 = sbr.rel (%p100) target = $region20
        $region19: #{tpu_custom_call.1} parent=15 // pred_region
          %s103 = sand.u32 %s37, 1
          %s104 = scalar_lea.sflag [#allocation3], %s103
          %s105 = sand.u32 %s37, 1
          %s106 = smul.addr %s105, 64
          %s107 = scalar_lea.vmem [#allocation2], %s106
          %s108 = smul.u32 4, %s20
          %s110 = ssub.s32 1024, 1024
          %111 = vsyncadd %s104, %s110
          %s112 = smul.addr %s108, 8
          %s113 = sadd.s32 %s21, %s112
          %s114 = smul.addr %s113, 32
          %s115 = scalar_lea.hbm %s0, %s114
          %s116 = sshll.u32 %s107, 4
          %s117 = int_to_ptr.vmem [resolvable:$true] %s116
          %122 = dma.hbm_to_vmem [thread:$0]  %s115, 1024, %s117, %s104, 32, 32, 2
        $region20: #{tpu_custom_call.1} parent=15 // pred_fallthru
          _
      $region16: #{tpu_custom_call.1} parent=5 // pred_fallthru
        _
      %p123 = scmp.le.s32.totalorder 1, %s13
      %p124 = scmp.lt.s32.totalorder %s13, 3
      %p125 = pnand %p123, %p124
      %p126 = pneg %p125
      // Predicated region
      $region21: #{tpu_custom_call.1} parent=5 // pred_check
        _
      $region22: #{tpu_custom_call.1} parent=5 // pred_check_branch
        %128 = sbr.rel (%p125) target = $region24
      $region23: #{tpu_custom_call.1} parent=5 // pred_region
        %s129 = ssub.s32 %s13, 1
        %s130 = sand.u32 %s40, 1
        %s131 = scalar_lea.sflag [#allocation3], %s130
        %s132 = sand.u32 %s40, 1
        %s133 = smul.addr %s132, 64
        %s134 = scalar_lea.vmem [#allocation2], %s133
        // Predicated region
        $region25: #{tpu_custom_call.1} parent=23 // pred_check
          %p135 = pneg %p53
        $region26: #{tpu_custom_call.1} parent=23 // pred_check_branch
          %137 = sbr.rel (%p135) target = $region28
        $region27: #{tpu_custom_call.1} parent=23 // pred_region
          %138 = dma.done %s131, 1024
        $region28: #{tpu_custom_call.1} parent=23 // pred_fallthru
          _
        %s139 = sand.u32 %s40, 1
        %s140 = scalar_lea.sflag [#allocation3], %s139
        %s141 = sand.u32 %s40, 1
        %s142 = smul.addr %s141, 64
        %s143 = scalar_lea.vmem [#allocation2], %s142
        %p144 = pneg %p53
        %p145 = pneg %p50
        %p146 = pneg %p81
        %p147 = pneg %p78
        %s148 = sand.u32 %s68, 1
        %s149 = scalar_lea.sflag [#allocation4], %s148
        %s150 = sand.u32 %s68, 1
        %s151 = smul.addr %s150, 120
        %s152 = scalar_lea.vmem [#allocation5], %s151
        %s153 = smul.u32 4, %s22
        %s154 = smul.u32 4, %s22
        %v155 = vld [vmem:[%s134] sm:$0x3]
        %v156 = vld [vmem:[%s134 + $0x10] sm:$0x3]
        %v157 = vld [vmem:[%s134 + $0x20] sm:$0x3]
        %v158 = vld [vmem:[%s134 + $0x30] sm:$0x3]
        %159 = vst [vmem:[%s152] sm:$0x3] %v155
        %160 = vst [vmem:[%s152 + $0x1e] sm:$0x3] %v156
        %161 = vst [vmem:[%s152 + $0x3c] sm:$0x3] %v157
        %162 = vst [vmem:[%s152 + $0x5a] sm:$0x3] %v158
        %s163 = scalar_lea.vmem %s134, 2 [#allocation2]
        %v164 = vld [vmem:[%s163] sm:$0x3]
        %v165 = vld [vmem:[%s163 + $0x10] sm:$0x3]
        %v166 = vld [vmem:[%s163 + $0x20] sm:$0x3]
        %v167 = vld [vmem:[%s163 + $0x30] sm:$0x3]
        %s168 = scalar_lea.vmem %s134, 4 [#allocation2]
        %v169 = vld [vmem:[%s168] sm:$0x3]
        %v170 = vld [vmem:[%s168 + $0x10] sm:$0x3]
        %v171 = vld [vmem:[%s168 + $0x20] sm:$0x3]
        %v172 = vld [vmem:[%s168 + $0x30] sm:$0x3]
        %v173 = vmul.f32 %v164, 0.75
        %v174 = vmul.f32 %v165, 0.75
        %v175 = vmul.f32 %v166, 0.75
        %v176 = vmul.f32 %v167, 0.75
        %v177 = vmul.f32 %v164, 0.25
        %v178 = vmul.f32 %v165, 0.25
        %v179 = vmul.f32 %v166, 0.25
        %v180 = vmul.f32 %v167, 0.25
        %v181 = vadd.f32 %v173, %v177
        %v182 = vadd.f32 %v174, %v178
        %v183 = vadd.f32 %v175, %v179
        %v184 = vadd.f32 %v176, %v180
        %s185 = scalar_lea.vmem %s152, 2 [#allocation5]
        %186 = vst [vmem:[%s185] sm:$0x3] %v181
        %187 = vst [vmem:[%s185 + $0x1e] sm:$0x3] %v182
        %188 = vst [vmem:[%s185 + $0x3c] sm:$0x3] %v183
        %189 = vst [vmem:[%s185 + $0x5a] sm:$0x3] %v184
        %v190 = vmul.f32 %v169, 0.25
        %v191 = vmul.f32 %v170, 0.25
        %v192 = vmul.f32 %v171, 0.25
        %v193 = vmul.f32 %v172, 0.25
        %v194 = vadd.f32 %v173, %v190
        %v195 = vadd.f32 %v174, %v191
        %v196 = vadd.f32 %v175, %v192
        %v197 = vadd.f32 %v176, %v193
        %s198 = scalar_lea.vmem %s152, 4 [#allocation5]
        %199 = vst [vmem:[%s198] sm:$0x3] %v194
        %200 = vst [vmem:[%s198 + $0x1e] sm:$0x3] %v195
        %201 = vst [vmem:[%s198 + $0x3c] sm:$0x3] %v196
        %202 = vst [vmem:[%s198 + $0x5a] sm:$0x3] %v197
        %v203 = vld [vmem:[%s168] sm:$0x3]
        %v204 = vld [vmem:[%s168 + $0x10] sm:$0x3]
        %v205 = vld [vmem:[%s168 + $0x20] sm:$0x3]
        %v206 = vld [vmem:[%s168 + $0x30] sm:$0x3]
        %v207 = vld [vmem:[%s163] sm:$0x3]
        %v208 = vld [vmem:[%s163 + $0x10] sm:$0x3]
        %v209 = vld [vmem:[%s163 + $0x20] sm:$0x3]
        %v210 = vld [vmem:[%s163 + $0x30] sm:$0x3]
        %s211 = scalar_lea.vmem %s134, 6 [#allocation2]
        %v212 = vld [vmem:[%s211] sm:$0x3]
        %v213 = vld [vmem:[%s211 + $0x10] sm:$0x3]
        %v214 = vld [vmem:[%s211 + $0x20] sm:$0x3]
        %v215 = vld [vmem:[%s211 + $0x30] sm:$0x3]
        %v216 = vmul.f32 %v203, 0.75
        %v217 = vmul.f32 %v204, 0.75
        %v218 = vmul.f32 %v205, 0.75
        %v219 = vmul.f32 %v206, 0.75
        %v220 = vmul.f32 %v207, 0.25
        %v221 = vmul.f32 %v208, 0.25
        %v222 = vmul.f32 %v209, 0.25
        %v223 = vmul.f32 %v210, 0.25
        %v224 = vadd.f32 %v216, %v220
        %v225 = vadd.f32 %v217, %v221
        %v226 = vadd.f32 %v218, %v222
        %v227 = vadd.f32 %v219, %v223
        %s228 = scalar_lea.vmem %s152, 6 [#allocation5]
        %229 = vst [vmem:[%s228] sm:$0x3] %v224
        %230 = vst [vmem:[%s228 + $0x1e] sm:$0x3] %v225
        %231 = vst [vmem:[%s228 + $0x3c] sm:$0x3] %v226
        %232 = vst [vmem:[%s228 + $0x5a] sm:$0x3] %v227
        %v233 = vmul.f32 %v212, 0.25
        %v234 = vmul.f32 %v213, 0.25
        %v235 = vmul.f32 %v214, 0.25
        %v236 = vmul.f32 %v215, 0.25
        %v237 = vadd.f32 %v216, %v233
        %v238 = vadd.f32 %v217, %v234
        %v239 = vadd.f32 %v218, %v235
        %v240 = vadd.f32 %v219, %v236
        %s241 = scalar_lea.vmem %s152, 8 [#allocation5]
        %242 = vst [vmem:[%s241] sm:$0x3] %v237
        %243 = vst [vmem:[%s241 + $0x1e] sm:$0x3] %v238
        %244 = vst [vmem:[%s241 + $0x3c] sm:$0x3] %v239
        %245 = vst [vmem:[%s241 + $0x5a] sm:$0x3] %v240
        %v246 = vld [vmem:[%s211] sm:$0x3]
        %v247 = vld [vmem:[%s211 + $0x10] sm:$0x3]
        %v248 = vld [vmem:[%s211 + $0x20] sm:$0x3]
        %v249 = vld [vmem:[%s211 + $0x30] sm:$0x3]
        %v250 = vld [vmem:[%s168] sm:$0x3]
        %v251 = vld [vmem:[%s168 + $0x10] sm:$0x3]
        %v252 = vld [vmem:[%s168 + $0x20] sm:$0x3]
        %v253 = vld [vmem:[%s168 + $0x30] sm:$0x3]
        %s254 = scalar_lea.vmem %s134, 8 [#allocation2]
        %v255 = vld [vmem:[%s254] sm:$0x3]
        %v256 = vld [vmem:[%s254 + $0x10] sm:$0x3]
        %v257 = vld [vmem:[%s254 + $0x20] sm:$0x3]
        %v258 = vld [vmem:[%s254 + $0x30] sm:$0x3]
        %v259 = vmul.f32 %v246, 0.75
        %v260 = vmul.f32 %v247, 0.75
        %v261 = vmul.f32 %v248, 0.75
        %v262 = vmul.f32 %v249, 0.75
        %v263 = vmul.f32 %v250, 0.25
        %v264 = vmul.f32 %v251, 0.25
        %v265 = vmul.f32 %v252, 0.25
        %v266 = vmul.f32 %v253, 0.25
        %v267 = vadd.f32 %v259, %v263
        %v268 = vadd.f32 %v260, %v264
        %v269 = vadd.f32 %v261, %v265
        %v270 = vadd.f32 %v262, %v266
        %s271 = scalar_lea.vmem %s152, 10 [#allocation5]
        %272 = vst [vmem:[%s271] sm:$0x3] %v267
        %273 = vst [vmem:[%s271 + $0x1e] sm:$0x3] %v268
        %274 = vst [vmem:[%s271 + $0x3c] sm:$0x3] %v269
        %275 = vst [vmem:[%s271 + $0x5a] sm:$0x3] %v270
        %v276 = vmul.f32 %v255, 0.25
        %v277 = vmul.f32 %v256, 0.25
        %v278 = vmul.f32 %v257, 0.25
        %v279 = vmul.f32 %v258, 0.25
        %v280 = vadd.f32 %v259, %v276
        %v281 = vadd.f32 %v260, %v277
        %v282 = vadd.f32 %v261, %v278
        %v283 = vadd.f32 %v262, %v279
        %s284 = scalar_lea.vmem %s152, 12 [#allocation5]
        %285 = vst [vmem:[%s284] sm:$0x3] %v280
        %286 = vst [vmem:[%s284 + $0x1e] sm:$0x3] %v281
        %287 = vst [vmem:[%s284 + $0x3c] sm:$0x3] %v282
        %288 = vst [vmem:[%s284 + $0x5a] sm:$0x3] %v283
        %v289 = vld [vmem:[%s254] sm:$0x3]
        %v290 = vld [vmem:[%s254 + $0x10] sm:$0x3]
        %v291 = vld [vmem:[%s254 + $0x20] sm:$0x3]
        %v292 = vld [vmem:[%s254 + $0x30] sm:$0x3]
        %v293 = vld [vmem:[%s211] sm:$0x3]
        %v294 = vld [vmem:[%s211 + $0x10] sm:$0x3]
        %v295 = vld [vmem:[%s211 + $0x20] sm:$0x3]
        %v296 = vld [vmem:[%s211 + $0x30] sm:$0x3]
        %s297 = scalar_lea.vmem %s134, 10 [#allocation2]
        %v298 = vld [vmem:[%s297] sm:$0x3]
        %v299 = vld [vmem:[%s297 + $0x10] sm:$0x3]
        %v300 = vld [vmem:[%s297 + $0x20] sm:$0x3]
        %v301 = vld [vmem:[%s297 + $0x30] sm:$0x3]
        %v302 = vmul.f32 %v289, 0.75
        %v303 = vmul.f32 %v290, 0.75
        %v304 = vmul.f32 %v291, 0.75
        %v305 = vmul.f32 %v292, 0.75
        %v306 = vmul.f32 %v293, 0.25
        %v307 = vmul.f32 %v294, 0.25
        %v308 = vmul.f32 %v295, 0.25
        %v309 = vmul.f32 %v296, 0.25
        %v310 = vadd.f32 %v302, %v306
        %v311 = vadd.f32 %v303, %v307
        %v312 = vadd.f32 %v304, %v308
        %v313 = vadd.f32 %v305, %v309
        %s314 = scalar_lea.vmem %s152, 14 [#allocation5]
        %315 = vst [vmem:[%s314] sm:$0x3] %v310
        %316 = vst [vmem:[%s314 + $0x1e] sm:$0x3] %v311
        %317 = vst [vmem:[%s314 + $0x3c] sm:$0x3] %v312
        %318 = vst [vmem:[%s314 + $0x5a] sm:$0x3] %v313
        %v319 = vmul.f32 %v298, 0.25
        %v320 = vmul.f32 %v299, 0.25
        %v321 = vmul.f32 %v300, 0.25
        %v322 = vmul.f32 %v301, 0.25
        %v323 = vadd.f32 %v302, %v319
        %v324 = vadd.f32 %v303, %v320
        %v325 = vadd.f32 %v304, %v321
        %v326 = vadd.f32 %v305, %v322
        %s327 = scalar_lea.vmem %s152, 16 [#allocation5]
        %328 = vst [vmem:[%s327] sm:$0x3] %v323
        %329 = vst [vmem:[%s327 + $0x1e] sm:$0x3] %v324
        %330 = vst [vmem:[%s327 + $0x3c] sm:$0x3] %v325
        %331 = vst [vmem:[%s327 + $0x5a] sm:$0x3] %v326
        %v332 = vld [vmem:[%s297] sm:$0x3]
        %v333 = vld [vmem:[%s297 + $0x10] sm:$0x3]
        %v334 = vld [vmem:[%s297 + $0x20] sm:$0x3]
        %v335 = vld [vmem:[%s297 + $0x30] sm:$0x3]
        %v336 = vld [vmem:[%s254] sm:$0x3]
        %v337 = vld [vmem:[%s254 + $0x10] sm:$0x3]
        %v338 = vld [vmem:[%s254 + $0x20] sm:$0x3]
        %v339 = vld [vmem:[%s254 + $0x30] sm:$0x3]
        %s340 = scalar_lea.vmem %s134, 12 [#allocation2]
        %v341 = vld [vmem:[%s340] sm:$0x3]
        %v342 = vld [vmem:[%s340 + $0x10] sm:$0x3]
        %v343 = vld [vmem:[%s340 + $0x20] sm:$0x3]
        %v344 = vld [vmem:[%s340 + $0x30] sm:$0x3]
        %v345 = vmul.f32 %v332, 0.75
        %v346 = vmul.f32 %v333, 0.75
        %v347 = vmul.f32 %v334, 0.75
        %v348 = vmul.f32 %v335, 0.75
        %v349 = vmul.f32 %v336, 0.25
        %v350 = vmul.f32 %v337, 0.25
        %v351 = vmul.f32 %v338, 0.25
        %v352 = vmul.f32 %v339, 0.25
        %v353 = vadd.f32 %v345, %v349
        %v354 = vadd.f32 %v346, %v350
        %v355 = vadd.f32 %v347, %v351
        %v356 = vadd.f32 %v348, %v352
        %s357 = scalar_lea.vmem %s152, 18 [#allocation5]
        %358 = vst [vmem:[%s357] sm:$0x3] %v353
        %359 = vst [vmem:[%s357 + $0x1e] sm:$0x3] %v354
        %360 = vst [vmem:[%s357 + $0x3c] sm:$0x3] %v355
        %361 = vst [vmem:[%s357 + $0x5a] sm:$0x3] %v356
        %v362 = vmul.f32 %v341, 0.25
        %v363 = vmul.f32 %v342, 0.25
        %v364 = vmul.f32 %v343, 0.25
        %v365 = vmul.f32 %v344, 0.25
        %v366 = vadd.f32 %v345, %v362
        %v367 = vadd.f32 %v346, %v363
        %v368 = vadd.f32 %v347, %v364
        %v369 = vadd.f32 %v348, %v365
        %s370 = scalar_lea.vmem %s152, 20 [#allocation5]
        %371 = vst [vmem:[%s370] sm:$0x3] %v366
        %372 = vst [vmem:[%s370 + $0x1e] sm:$0x3] %v367
        %373 = vst [vmem:[%s370 + $0x3c] sm:$0x3] %v368
        %374 = vst [vmem:[%s370 + $0x5a] sm:$0x3] %v369
        %v375 = vld [vmem:[%s340] sm:$0x3]
        %v376 = vld [vmem:[%s340 + $0x10] sm:$0x3]
        %v377 = vld [vmem:[%s340 + $0x20] sm:$0x3]
        %v378 = vld [vmem:[%s340 + $0x30] sm:$0x3]
        %v379 = vld [vmem:[%s297] sm:$0x3]
        %v380 = vld [vmem:[%s297 + $0x10] sm:$0x3]
        %v381 = vld [vmem:[%s297 + $0x20] sm:$0x3]
        %v382 = vld [vmem:[%s297 + $0x30] sm:$0x3]
        %s383 = scalar_lea.vmem %s134, 14 [#allocation2]
        %v384 = vld [vmem:[%s383] sm:$0x3]
        %v385 = vld [vmem:[%s383 + $0x10] sm:$0x3]
        %v386 = vld [vmem:[%s383 + $0x20] sm:$0x3]
        %v387 = vld [vmem:[%s383 + $0x30] sm:$0x3]
        %v388 = vmul.f32 %v375, 0.75
        %v389 = vmul.f32 %v376, 0.75
        %v390 = vmul.f32 %v377, 0.75
        %v391 = vmul.f32 %v378, 0.75
        %v392 = vmul.f32 %v379, 0.25
        %v393 = vmul.f32 %v380, 0.25
        %v394 = vmul.f32 %v381, 0.25
        %v395 = vmul.f32 %v382, 0.25
        %v396 = vadd.f32 %v388, %v392
        %v397 = vadd.f32 %v389, %v393
        %v398 = vadd.f32 %v390, %v394
        %v399 = vadd.f32 %v391, %v395
        %s400 = scalar_lea.vmem %s152, 22 [#allocation5]
        %401 = vst [vmem:[%s400] sm:$0x3] %v396
        %402 = vst [vmem:[%s400 + $0x1e] sm:$0x3] %v397
        %403 = vst [vmem:[%s400 + $0x3c] sm:$0x3] %v398
        %404 = vst [vmem:[%s400 + $0x5a] sm:$0x3] %v399
        %v405 = vmul.f32 %v384, 0.25
        %v406 = vmul.f32 %v385, 0.25
        %v407 = vmul.f32 %v386, 0.25
        %v408 = vmul.f32 %v387, 0.25
        %v409 = vadd.f32 %v388, %v405
        %v410 = vadd.f32 %v389, %v406
        %v411 = vadd.f32 %v390, %v407
        %v412 = vadd.f32 %v391, %v408
        %s413 = scalar_lea.vmem %s152, 24 [#allocation5]
        %414 = vst [vmem:[%s413] sm:$0x3] %v409
        %415 = vst [vmem:[%s413 + $0x1e] sm:$0x3] %v410
        %416 = vst [vmem:[%s413 + $0x3c] sm:$0x3] %v411
        %417 = vst [vmem:[%s413 + $0x5a] sm:$0x3] %v412
        %v418 = vld [vmem:[%s383] sm:$0x3]
        %v419 = vld [vmem:[%s383 + $0x10] sm:$0x3]
        %v420 = vld [vmem:[%s383 + $0x20] sm:$0x3]
        %v421 = vld [vmem:[%s383 + $0x30] sm:$0x3]
        %v422 = vld [vmem:[%s340] sm:$0x3]
        %v423 = vld [vmem:[%s340 + $0x10] sm:$0x3]
        %v424 = vld [vmem:[%s340 + $0x20] sm:$0x3]
        %v425 = vld [vmem:[%s340 + $0x30] sm:$0x3]
        %v426 = vmul.f32 %v418, 0.75
        %v427 = vmul.f32 %v419, 0.75
        %v428 = vmul.f32 %v420, 0.75
        %v429 = vmul.f32 %v421, 0.75
        %v430 = vmul.f32 %v422, 0.25
        %v431 = vmul.f32 %v423, 0.25
        %v432 = vmul.f32 %v424, 0.25
        %v433 = vmul.f32 %v425, 0.25
        %v434 = vadd.f32 %v426, %v430
        %v435 = vadd.f32 %v427, %v431
        %v436 = vadd.f32 %v428, %v432
        %v437 = vadd.f32 %v429, %v433
        %s438 = scalar_lea.vmem %s152, 26 [#allocation5]
        %439 = vst [vmem:[%s438] sm:$0x3] %v434
        %440 = vst [vmem:[%s438 + $0x1e] sm:$0x3] %v435
        %441 = vst [vmem:[%s438 + $0x3c] sm:$0x3] %v436
        %442 = vst [vmem:[%s438 + $0x5a] sm:$0x3] %v437
        %v443 = vmul.f32 %v418, 0.25
        %v444 = vmul.f32 %v419, 0.25
        %v445 = vmul.f32 %v420, 0.25
        %v446 = vmul.f32 %v421, 0.25
        %v447 = vadd.f32 %v426, %v443
        %v448 = vadd.f32 %v427, %v444
        %v449 = vadd.f32 %v428, %v445
        %v450 = vadd.f32 %v429, %v446
        %s451 = scalar_lea.vmem %s152, 28 [#allocation5]
        %452 = vst [vmem:[%s451] sm:$0x3] %v447
        %453 = vst [vmem:[%s451 + $0x1e] sm:$0x3] %v448
        %454 = vst [vmem:[%s451 + $0x3c] sm:$0x3] %v449
        %455 = vst [vmem:[%s451 + $0x5a] sm:$0x3] %v450
        %s456 = sand.u32 %s68, 1
        %s457 = scalar_lea.sflag [#allocation4], %s456
        %s458 = sand.u32 %s68, 1
        %s459 = smul.addr %s458, 120
        %s460 = scalar_lea.vmem [#allocation5], %s459
        // Predicated region
        $region29: #{tpu_custom_call.1} parent=23 // pred_check
          %p461 = pneg %p78
        $region30: #{tpu_custom_call.1} parent=23 // pred_check_branch
          %463 = sbr.rel (%p461) target = $region32
        $region31: #{tpu_custom_call.1} parent=23 // pred_region
          %s464 = smul.u32 4, %s22
          %s466 = ssub.s32 1920, 1920
          %467 = vsyncadd %s457, %s466
          %s468 = smul.addr %s464, 15
          %s469 = sadd.s32 %s23, %s468
          %s470 = smul.addr %s469, 32
          %s471 = scalar_lea.hbm %s1, %s470
          %s472 = sshll.u32 %s460, 4
          %s473 = int_to_ptr.vmem [resolvable:$true] %s472
          %478 = dma.vmem_to_hbm [thread:$0]  %s473, 1920, %s471, %s457, 32, 32, 2
        $region32: #{tpu_custom_call.1} parent=23 // pred_fallthru
          _
      $region24: #{tpu_custom_call.1} parent=5 // pred_fallthru
        _
      %p479 = scmp.le.s32.totalorder 2, %s13
      // Predicated region
      $region33: #{tpu_custom_call.1} parent=5 // pred_check
        %p480 = pneg %p479
      $region34: #{tpu_custom_call.1} parent=5 // pred_check_branch
        %482 = sbr.rel (%p480) target = $region36
      $region35: #{tpu_custom_call.1} parent=5 // pred_region
        %s483 = ssub.s32 %s13, 2
        // Predicated region
        $region37: #{tpu_custom_call.1} parent=35 // pred_check
          %p484 = pneg %p84
        $region38: #{tpu_custom_call.1} parent=35 // pred_check_branch
          %486 = sbr.rel (%p484) target = $region40
        $region39: #{tpu_custom_call.1} parent=35 // pred_region
          %s487 = sand.u32 %s69, 1
          %s488 = scalar_lea.sflag [#allocation4], %s487
          %s489 = sand.u32 %s69, 1
          %s490 = smul.addr %s489, 120
          %s491 = scalar_lea.vmem [#allocation5], %s490
          %492 = dma.done %s488, 1920
        $region40: #{tpu_custom_call.1} parent=35 // pred_fallthru
          _
      $region36: #{tpu_custom_call.1} parent=5 // pred_fallthru
        _
    $region6: #{tpu_custom_call.1} parent=1 // loop_footer
      %s17 = sadd.s32 1, %s13
    $region7: #{tpu_custom_call.1} parent=1 // loop_footer_branch
      %12 = sbr.rel target = $region3
    $region8: #{tpu_custom_call.1} parent=1 // loop_exit
      _
    %493 = vsyncpa [#allocation3], 1
    %s494 = scalar_lea.sflag [#allocation3], 1
    %495 = vsyncpa %s494, 1
    %496 = vsyncpa [#allocation4], 1
    %s497 = scalar_lea.sflag [#allocation4], 1
    %498 = vsyncpa %s497, 1

</llo_original>
